<compile_context>
chip_gen: v7x
topology: tpu7x:2x2x1
jax: 0.10.0
libtpu: 0.0.40
codegen_flags: <defaults>
</compile_context>

<pallas_src>
import functools

import jax
import jax.numpy as jnp
from jax import lax
from jax.experimental import pallas as pl
from jax.experimental.pallas import tpu as pltpu


_CHUNK_ELEM_BUDGET = 512 * 1024   # f32 elements live per chunk (~2 MiB)
_MAX_CHUNKS = 32                  # bound on unrolled chunk count


def _chunk_plan(total, rows):
    """Static [(start, size), ...] splitting `total` lanes so that
    rows * size f32 temporaries stay under _CHUNK_ELEM_BUDGET, with at most
    _MAX_CHUNKS unrolled pieces."""
    if total <= 0:
        return [(0, total)]
    if rows * total <= _CHUNK_ELEM_BUDGET:
        return [(0, total)]
    chunk = max(128, (_CHUNK_ELEM_BUDGET // max(rows, 1)) // 128 * 128)
    min_chunk = -(-total // _MAX_CHUNKS)          # ceil
    min_chunk = -(-min_chunk // 128) * 128        # round up to lane multiple
    chunk = min(max(chunk, min_chunk), total)
    return [(s, min(chunk, total - s)) for s in range(0, total, chunk)]


def _excite(y, w1, w2):
    """SE excitation: sigmoid(relu(y @ w1.T) @ w2.T).  y: (Bt, C) f32."""
    C = y.shape[-1]
    w1 = w1.astype(jnp.float32)
    w2 = w2.astype(jnp.float32)
    if C >= 256:
        # Large C: two small MXU dots free the VPU/XLU slots.
        h = jnp.maximum(
            lax.dot_general(y, w1, (((1,), (1,)), ((), ())),
                            preferred_element_type=jnp.float32), 0.0)
        a = jax.nn.sigmoid(
            lax.dot_general(h, w2, (((1,), (1,)), ((), ())),
                            preferred_element_type=jnp.float32))
    else:
        # Small C: VPU broadcast-multiply + lane reductions.
        h = jnp.maximum(jnp.sum(y[:, None, :] * w1[None, :, :], axis=-1), 0.0)
        a = jax.nn.sigmoid(jnp.sum(h[:, None, :] * w2[None, :, :], axis=-1))
    return a


# --------------------------------------------------------------------------
# Fused single-pass kernel (whole (Bt, C, HW) image block resident in VMEM).
# --------------------------------------------------------------------------
def _sab_fused_kernel(x_ref, w1_ref, w2_ref, out_ref, attn_ref):
    # x_ref/out_ref: (Bt, C, HW);  w1: (Cr, C);  w2: (C, Cr);  attn: (Bt, 1, C)
    Bt, C, HW = x_ref.shape
    inv_hw = jnp.float32(1.0 / HW)
    plan = _chunk_plan(HW, Bt * C)

    # ---- squeeze: global average pool (chunked, unrolled, f32 accumulate) ----
    sums = jnp.zeros((Bt, C), jnp.float32)
    for start, size in plan:
        chunk = x_ref[:, :, pl.ds(start, size)].astype(jnp.float32)
        sums = sums + jnp.sum(chunk, axis=-1)
    y = sums * inv_hw

    # ---- excitation (tiny fc -> relu -> fc -> sigmoid) ----
    a = _excite(y, w1_ref[...], w2_ref[...])
    attn_ref[...] = a[:, None, :].astype(attn_ref.dtype)

    # ---- scale: channel-wise rescale of x (mem-bound epilogue) ----
    a3 = a[:, :, None]
    for start, size in plan:
        chunk = x_ref[:, :, pl.ds(start, size)].astype(jnp.float32)
        out_ref[:, :, pl.ds(start, size)] = (chunk * a3).astype(out_ref.dtype)


# --------------------------------------------------------------------------
# Two-pass fallback for images too large to hold in one VMEM block.
# Pass 1: HW-tiled pool + excitation (attention weights out).
# Pass 2: HW-tiled channel rescale.
# --------------------------------------------------------------------------
def _pool_excite_kernel(x_ref, w1_ref, w2_ref, attn_ref, sums_ref, *,
                        hw_total, tile_hw):
    # x_ref: (1, C, tile_hw);  attn_ref: (1, 1, C);  sums_ref: (1, C) f32 scratch
    t = pl.program_id(1)
    n_t = pl.num_programs(1)
    _, C, T = x_ref.shape

    @pl.when(t == 0)
    def _():
        sums_ref[...] = jnp.zeros_like(sums_ref)

    needs_mask = (hw_total % tile_hw) != 0
    partial = jnp.zeros((1, C), jnp.float32)
    for start, size in _chunk_plan(T, C):
        chunk = x_ref[:, :, pl.ds(start, size)].astype(jnp.float32)
        if needs_mask:
            idx = (t * tile_hw + start
                   + lax.broadcasted_iota(jnp.int32, (1, C, size), 2))
            chunk = jnp.where(idx < hw_total, chunk, 0.0)
        partial = partial + jnp.sum(chunk, axis=-1)
    sums_ref[...] += partial

    @pl.when(t == n_t - 1)
    def _():
        y = sums_ref[...] * jnp.float32(1.0 / hw_total)
        a = _excite(y, w1_ref[...], w2_ref[...])
        attn_ref[...] = a[:, None, :].astype(attn_ref.dtype)


def _scale_kernel(attn_ref, x_ref, out_ref):
    # attn_ref: (1, C, 1);  x_ref/out_ref: (1, C, tile_hw)
    _, C, T = x_ref.shape
    a3 = attn_ref[...].astype(jnp.float32)          # (1, C, 1)
    for start, size in _chunk_plan(T, C):
        chunk = x_ref[:, :, pl.ds(start, size)].astype(jnp.float32)
        out_ref[:, :, pl.ds(start, size)] = (chunk * a3).astype(out_ref.dtype)


# --------------------------------------------------------------------------
# Host-side wrapper.
# --------------------------------------------------------------------------
def _tpu_generation_info():
    """Best-effort (two_tensorcores, physical_vmem_bytes) from device_kind."""
    try:
        kind = jax.devices()[0].device_kind.lower()
    except Exception:  # pragma: no cover - defensive
        kind = ""
    is_v7 = ("v7" in kind) or ("7x" in kind)
    two_tc = is_v7 or ("v4" in kind) or ("v5p" in kind)
    vmem = (64 << 20) if is_v7 else (128 << 20)
    return two_tc, vmem


def _choose_batch_tile(B, per_image_bytes, budget, two_tc):
    """Largest divisor of B whose (Bt, C, HW) block fits the budget; on
    two-TensorCore parts shrink (if possible) so the grid has >= 2 steps."""
    cap = max(1, budget // max(per_image_bytes, 1))
    bt = 1
    for d in range(1, B + 1):
        if B % d == 0 and d <= cap:
            bt = d
    if two_tc and B >= 2 and B // bt < 2:
        for d in range(bt - 1, 0, -1):
            if B % d == 0 and B // d >= 2:
                bt = d
                break
    return bt


def sparse_attention_block(x, w1, w2, *, target_block_bytes=None):
    """x: (B, C, H, W).  w1: (C//r, C) = fc1.weight.  w2: (C, C//r) = fc2.weight.
    Returns (x * a[:, :, None, None], a) — the SparseAttentionBlock forward."""
    B, C, H, W = x.shape
    HW = H * W
    Cr = w1.shape[0]
    itemsize = jnp.dtype(x.dtype).itemsize
    x_flat = x.reshape(B, C, HW)

    two_tc, vmem_phys = _tpu_generation_info()
    if target_block_bytes is None:
        # v7x has only 64 MiB VMEM; others can afford larger blocks.
        target_block_bytes = (12 << 20) if vmem_phys <= (64 << 20) else (20 << 20)
    vmem_cap = (48 << 20) if vmem_phys <= (64 << 20) else (100 << 20)
    weight_bytes = 2 * Cr * C * 4

    per_image = C * HW * itemsize

    if per_image <= target_block_bytes:
        # ---------------- fused single-pass path ----------------
        Bt = _choose_batch_tile(B, per_image, target_block_bytes, two_tc)
        block_bytes = Bt * per_image
        vmem_limit = int(min(vmem_cap,
                             max(32 << 20, 4 * block_bytes + weight_bytes + (8 << 20))))
        out_flat, attn_b1c = pl.pallas_call(
            _sab_fused_kernel,
            out_shape=(
                jax.ShapeDtypeStruct((B, C, HW), x.dtype),
                jax.ShapeDtypeStruct((B, 1, C), jnp.float32),
            ),
            grid_spec=pltpu.PrefetchScalarGridSpec(
                num_scalar_prefetch=0,
                grid=(B // Bt,),
                in_specs=[
                    pl.BlockSpec((Bt, C, HW), lambda b: (b, 0, 0)),
                    pl.BlockSpec((Cr, C), lambda b: (0, 0)),
                    pl.BlockSpec((C, Cr), lambda b: (0, 0)),
                ],
                out_specs=[
                    pl.BlockSpec((Bt, C, HW), lambda b: (b, 0, 0)),
                    pl.BlockSpec((Bt, 1, C), lambda b: (b, 0, 0)),
                ],
            ),
            compiler_params=pltpu.CompilerParams(
                dimension_semantics=("parallel",),
                vmem_limit_bytes=vmem_limit,
            ),
        )(x_flat, w1, w2)
    else:
        # ---------------- two-pass HW-tiled path ----------------
        tile_hw = (target_block_bytes // (C * itemsize)) // 128 * 128
        tile_hw = min(max(tile_hw, 128), HW)
        n_t = pl.cdiv(HW, tile_hw)
        block_bytes = C * tile_hw * itemsize
        vmem_limit = int(min(vmem_cap,
                             max(32 << 20, 4 * block_bytes + weight_bytes + (8 << 20))))

        # Pass 1: pooled mean + excitation -> attention weights (B, 1, C).
        attn_b1c = pl.pallas_call(
            functools.partial(_pool_excite_kernel, hw_total=HW, tile_hw=tile_hw),
            out_shape=jax.ShapeDtypeStruct((B, 1, C), jnp.float32),
            grid_spec=pltpu.PrefetchScalarGridSpec(
                num_scalar_prefetch=0,
                grid=(B, n_t),
                in_specs=[
                    pl.BlockSpec((1, C, tile_hw), lambda b, t: (b, 0, t)),
                    pl.BlockSpec((Cr, C), lambda b, t: (0, 0)),
                    pl.BlockSpec((C, Cr), lambda b, t: (0, 0)),
                ],
                out_specs=pl.BlockSpec((1, 1, C), lambda b, t: (b, 0, 0)),
                scratch_shapes=[pltpu.VMEM((1, C), jnp.float32)],
            ),
            compiler_params=pltpu.CompilerParams(
                dimension_semantics=("parallel", "arbitrary"),
                vmem_limit_bytes=vmem_limit,
            ),
        )(x_flat, w1, w2)

        # Pass 2: channel-wise rescale (attention broadcast along lanes).
        attn_bc1 = attn_b1c.reshape(B, C, 1)
        out_flat = pl.pallas_call(
            _scale_kernel,
            out_shape=jax.ShapeDtypeStruct((B, C, HW), x.dtype),
            grid_spec=pltpu.PrefetchScalarGridSpec(
                num_scalar_prefetch=0,
                grid=(B, n_t),
                in_specs=[
                    pl.BlockSpec((1, C, 1), lambda b, t: (b, 0, 0)),
                    pl.BlockSpec((1, C, tile_hw), lambda b, t: (b, 0, t)),
                ],
                out_specs=pl.BlockSpec((1, C, tile_hw), lambda b, t: (b, 0, t)),
            ),
            compiler_params=pltpu.CompilerParams(
                dimension_semantics=("parallel", "parallel"),
                vmem_limit_bytes=vmem_limit,
            ),
        )(attn_bc1, x_flat)

    return out_flat.reshape(B, C, H, W), attn_b1c.reshape(B, C)


def _reference(x, w1, w2):
    # Pure-JAX reference mirroring the PyTorch forward (high-precision dots).
    xf = x.astype(jnp.float32)
    y = jnp.mean(xf, axis=(2, 3))                                    # avg_pool
    h = jnp.maximum(
        jnp.einsum('bc,kc->bk', y, w1, precision=jax.lax.Precision.HIGHEST), 0.0)
    a = jax.nn.sigmoid(
        jnp.einsum('bk,ck->bc', h, w2, precision=jax.lax.Precision.HIGHEST))
    return (xf * a[:, :, None, None]).astype(x.dtype), a


# TODO(synk): the rest of DSAN (ResNet backbone, MFF-AN conv/BN blocks,
# dropout + linear classifier heads) is not translated here; only the
# SparseAttentionBlock forward is implemented as Pallas kernels.

if __name__ == "__main__":
    key = jax.random.PRNGKey(0)
    kx1, kx2, kx3, k1, k2 = jax.random.split(key, 5)

    # in_features = C = 32, reduction_ratio = 16 -> hidden = 2 (bias-free fc).
    B, C, r = 2, 32, 16
    Cr = C // r
    w1 = jax.random.normal(k1, (Cr, C), dtype=jnp.float32) * (1.0 / jnp.sqrt(C))
    w2 = jax.random.normal(k2, (C, Cr), dtype=jnp.float32) * (1.0 / jnp.sqrt(Cr))

    fn = jax.jit(sparse_attention_block)

    # 1) Fused single-pass path, f32 I/O.
    x = jax.random.normal(kx1, (B, C, 16, 16), dtype=jnp.float32)
    out, attn = fn(x, w1, w2)
    jax.block_until_ready((out, attn))
    ref_out, ref_attn = _reference(x, w1, w2)
    assert out.shape == (B, C, 16, 16) and attn.shape == (B, C)
    assert jnp.allclose(out, ref_out, atol=1e-4, rtol=1e-4)
    assert jnp.allclose(attn, ref_attn, atol=1e-4, rtol=1e-4)

    # 2) Fused path with bf16 I/O (halves HBM traffic; f32 accumulation inside).
    xb = jax.random.normal(kx2, (B, C, 32, 32), dtype=jnp.float32).astype(jnp.bfloat16)
    out_b, attn_b = fn(xb, w1, w2)
    jax.block_until_ready((out_b, attn_b))
    ref_out_b, ref_attn_b = _reference(xb, w1, w2)
    assert out_b.dtype == jnp.bfloat16
    assert jnp.allclose(out_b.astype(jnp.float32), ref_out_b.astype(jnp.float32),
                        atol=3e-2, rtol=3e-2)
    assert jnp.allclose(attn_b, ref_attn_b, atol=1e-3, rtol=1e-3)

    # 3) Two-pass HW-tiled fallback, forced via a tiny block budget; HW (2500)
    #    is not a multiple of the 384-lane tile, exercising the tail mask.
    xt = jax.random.normal(kx3, (B, C, 50, 50), dtype=jnp.float32)
    fn_two_pass = jax.jit(
        functools.partial(sparse_attention_block, target_block_bytes=48 * 1024))
    out_t, attn_t = fn_two_pass(xt, w1, w2)
    jax.block_until_ready((out_t, attn_t))
    ref_out_t, ref_attn_t = _reference(xt, w1, w2)
    assert out_t.shape == (B, C, 50, 50) and attn_t.shape == (B, C)
    assert jnp.allclose(out_t, ref_out_t, atol=1e-4, rtol=1e-4)
    assert jnp.allclose(attn_t, ref_attn_t, atol=1e-4, rtol=1e-4)

    print("KERNEL_OK")
</pallas_src>

<mosaic_0001>
module attributes {stable_mosaic.version = 11 : i64} {
  func.func @_sab_fused_kernel(%arg0: i32, %arg1: memref<2x32x256xf32, #tpu.memory_space<vmem>>, %arg2: memref<2x32xf32, #tpu.memory_space<vmem>>, %arg3: memref<32x2xf32, #tpu.memory_space<vmem>>, %arg4: memref<2x32x256xf32, #tpu.memory_space<vmem>>, %arg5: memref<2x1x32xf32, #tpu.memory_space<vmem>>) attributes {dimension_semantics = [#tpu.dimension_semantics<parallel>], iteration_bounds = array<i64: 1>, scalar_prefetch = 0 : i64, scratch_operands = 0 : i64, tpu.core_type = #tpu.core_type<tc>, window_params = [{transform_indices = @transform_0, window_bounds = array<i64: 2, 32, 256>}, {pipeline_mode = #tpu.pipeline_mode<synchronous>, transform_indices = @transform_1, window_bounds = array<i64: 2, 32>}, {pipeline_mode = #tpu.pipeline_mode<synchronous>, transform_indices = @transform_2, window_bounds = array<i64: 32, 2>}, {transform_indices = @transform_3, window_bounds = array<i64: 2, 32, 256>}, {transform_indices = @transform_4, window_bounds = array<i64: 2, 1, 32>}]} {
    %cst = arith.constant 0.000000e+00 : f32
    %0 = vector.broadcast %cst : f32 to vector<2x32xf32>
    %c0 = arith.constant 0 : index
    %c0_0 = arith.constant 0 : index
    %c0_1 = arith.constant 0 : index
    %1 = vector.load %arg1[%c0, %c0_0, %c0_1] : memref<2x32x256xf32, #tpu.memory_space<vmem>>, vector<2x32x256xf32>
    %cst_2 = arith.constant dense<0.000000e+00> : vector<2x32xf32>
    %2 = vector.multi_reduction <add>, %1, %cst_2 [2] : vector<2x32x256xf32> to vector<2x32xf32>
    %3 = arith.addf %0, %2 : vector<2x32xf32>
    %cst_3 = arith.constant 3.906250e-03 : f32
    %4 = vector.broadcast %cst_3 : f32 to vector<2x32xf32>
    %5 = arith.mulf %3, %4 : vector<2x32xf32>
    %c0_4 = arith.constant 0 : index
    %c0_5 = arith.constant 0 : index
    %6 = vector.load %arg2[%c0_4, %c0_5] : memref<2x32xf32, #tpu.memory_space<vmem>>, vector<2x32xf32>
    %c0_6 = arith.constant 0 : index
    %c0_7 = arith.constant 0 : index
    %7 = vector.load %arg3[%c0_6, %c0_7] : memref<32x2xf32, #tpu.memory_space<vmem>>, vector<32x2xf32>
    %8 = vector.shape_cast %5 : vector<2x32xf32> to vector<2x1x32xf32>
    %9 = vector.shape_cast %6 : vector<2x32xf32> to vector<1x2x32xf32>
    %10 = vector.broadcast %8 : vector<2x1x32xf32> to vector<2x2x32xf32>
    %11 = vector.broadcast %9 : vector<1x2x32xf32> to vector<2x2x32xf32>
    %12 = arith.mulf %10, %11 : vector<2x2x32xf32>
    %cst_8 = arith.constant dense<0.000000e+00> : vector<2x2xf32>
    %13 = vector.multi_reduction <add>, %12, %cst_8 [2] : vector<2x2x32xf32> to vector<2x2xf32>
    %cst_9 = arith.constant 0.000000e+00 : f32
    %14 = vector.broadcast %cst_9 : f32 to vector<2x2xf32>
    %15 = arith.maximumf %13, %14 : vector<2x2xf32>
    %16 = vector.shape_cast %15 : vector<2x2xf32> to vector<2x1x2xf32>
    %17 = vector.shape_cast %7 : vector<32x2xf32> to vector<1x32x2xf32>
    %18 = vector.broadcast %16 : vector<2x1x2xf32> to vector<2x32x2xf32>
    %19 = vector.broadcast %17 : vector<1x32x2xf32> to vector<2x32x2xf32>
    %20 = arith.mulf %18, %19 : vector<2x32x2xf32>
    %cst_10 = arith.constant dense<0.000000e+00> : vector<2x32xf32>
    %21 = vector.multi_reduction <add>, %20, %cst_10 [2] : vector<2x32x2xf32> to vector<2x32xf32>
    %22 = arith.negf %21 : vector<2x32xf32>
    %23 = math.exp %22 : vector<2x32xf32>
    %cst_11 = arith.constant 1.000000e+00 : f32
    %24 = vector.broadcast %cst_11 : f32 to vector<2x32xf32>
    %25 = arith.addf %24, %23 : vector<2x32xf32>
    %26 = arith.divf %24, %25 : vector<2x32xf32>
    %27 = vector.shape_cast %26 : vector<2x32xf32> to vector<2x1x32xf32>
    %c0_12 = arith.constant 0 : index
    %c0_13 = arith.constant 0 : index
    %c0_14 = arith.constant 0 : index
    %28 = vector.load %arg5[%c0_12, %c0_13, %c0_14] : memref<2x1x32xf32, #tpu.memory_space<vmem>>, vector<2x1x32xf32>
    tpu.vector_store %arg5[%c0_12, %c0_13, %c0_14], %27 {strides = array<i32>} : memref<2x1x32xf32, #tpu.memory_space<vmem>>, vector<2x1x32xf32>,
    %29 = vector.shape_cast %26 : vector<2x32xf32> to vector<2x32x1xf32>
    %c0_15 = arith.constant 0 : index
    %c0_16 = arith.constant 0 : index
    %c0_17 = arith.constant 0 : index
    %30 = vector.load %arg1[%c0_15, %c0_16, %c0_17] : memref<2x32x256xf32, #tpu.memory_space<vmem>>, vector<2x32x256xf32>
    %31 = vector.broadcast %29 : vector<2x32x1xf32> to vector<2x32x256xf32>
    %32 = arith.mulf %30, %31 : vector<2x32x256xf32>
    %c0_18 = arith.constant 0 : index
    %c0_19 = arith.constant 0 : index
    %c0_20 = arith.constant 0 : index
    %33 = vector.load %arg4[%c0_18, %c0_19, %c0_20] : memref<2x32x256xf32, #tpu.memory_space<vmem>>, vector<2x32x256xf32>
    tpu.vector_store %arg4[%c0_18, %c0_19, %c0_20], %32 {strides = array<i32>} : memref<2x32x256xf32, #tpu.memory_space<vmem>>, vector<2x32x256xf32>,
    return
  }
  func.func @transform_0(%arg0: i32) -> (i32, i32, i32) {
    %c0_i32 = arith.constant 0 : i32
    %c0_i32_0 = arith.constant 0 : i32
    %c0_i32_1 = arith.constant 0 : i32
    return %arg0, %c0_i32, %c0_i32_0 : i32, i32, i32
  }
  func.func @transform_1(%arg0: i32) -> (i32, i32) {
    %c0_i32 = arith.constant 0 : i32
    %c0_i32_0 = arith.constant 0 : i32
    %c0_i32_1 = arith.constant 0 : i32
    return %c0_i32, %c0_i32_0 : i32, i32
  }
  func.func @transform_2(%arg0: i32) -> (i32, i32) {
    %c0_i32 = arith.constant 0 : i32
    %c0_i32_0 = arith.constant 0 : i32
    %c0_i32_1 = arith.constant 0 : i32
    return %c0_i32, %c0_i32_0 : i32, i32
  }
  func.func @transform_3(%arg0: i32) -> (i32, i32, i32) {
    %c0_i32 = arith.constant 0 : i32
    %c0_i32_0 = arith.constant 0 : i32
    %c0_i32_1 = arith.constant 0 : i32
    return %arg0, %c0_i32, %c0_i32_0 : i32, i32, i32
  }
  func.func @transform_4(%arg0: i32) -> (i32, i32, i32) {
    %c0_i32 = arith.constant 0 : i32
    %c0_i32_0 = arith.constant 0 : i32
    %c0_i32_1 = arith.constant 0 : i32
    return %arg0, %c0_i32, %c0_i32_0 : i32, i32, i32
  }
}

</mosaic_0001>

<llo_original>
// kernel: sparse_attention_block.1
$region0: #{sparse_attention_block.1}
  #allocation0 [shape = 'u32[]', space=smem, size = 0x4, offset = 0x4, fixed_abs, tag = 'smem constant byte address 0x4 - core index']
  #allocation1 [shape = 'u32[144,128]{1,0:T(1,128)}', space=vmem, size = 0x12000, scoped, tag = 'internal scratch']
  %s0 = inlined_call_operand.vmem [shape: f32[2,32,256], index: 0, kind: input, shape index: {}]
  %s1 = inlined_call_operand.vmem [shape: f32[2,32], index: 1, kind: input, shape index: {}]
  %s2 = inlined_call_operand.vmem [shape: f32[32,2], index: 2, kind: input, shape index: {}]
  %s3 = inlined_call_operand.vmem [shape: f32[2,32,256], index: 3, kind: output, shape index: {0}]
  %s4 = inlined_call_operand.hbm [shape: f32[2,1,32], index: 4, kind: output, shape index: {1}]
  %5 = xla_tuple %s3, %s4
  %s6 = sld [smem:[#allocation0]]
  $region30: #{sparse_attention_block.1} parent=0
    _
  %s8 = ssub.s32 1, %s6
  %s9 = scalar_select 0, %s8, %s6
  $region1: #{sparse_attention_block.1} parent=0
    #allocation2 [shape = 'u8[1024]{0}', space=vmem, size = 0x400, scoped, tag = 'output window, operand 1, single buffered']
    #allocation3 [shape = 's32[1]{0}', space=sflag, size = 0x4, scoped, tag = 'scoped memory for sparse_attention_block.1']
    %10 = vsyncpa [#allocation3], 0
    // Predicated region
    $region2: #{sparse_attention_block.1} parent=1 // pred_check
      _
    $region3: #{sparse_attention_block.1} parent=1 // pred_check_branch
      %12 = sbr.rel (0) target = $region5
    $region4: #{sparse_attention_block.1} parent=1 // pred_region
      _
    $region5: #{sparse_attention_block.1} parent=1 // pred_fallthru
      _
    // Predicated region
    $region6: #{sparse_attention_block.1} parent=1 // pred_check
      _
    $region7: #{sparse_attention_block.1} parent=1 // pred_check_branch
      %14 = sbr.rel (0) target = $region9
    $region8: #{sparse_attention_block.1} parent=1 // pred_region
      _
    $region9: #{sparse_attention_block.1} parent=1 // pred_fallthru
      _
    // Predicated region
    $region10: #{sparse_attention_block.1} parent=1 // pred_check
      _
    $region11: #{sparse_attention_block.1} parent=1 // pred_check_branch
      %16 = sbr.rel (0) target = $region13
    $region12: #{sparse_attention_block.1} parent=1 // pred_region
      _
    $region13: #{sparse_attention_block.1} parent=1 // pred_fallthru
      _
    %v17 = vld [vmem:[%s0] sm:$0xff]
    %v18 = vld [vmem:[%s0 + $0x8] sm:$0xff]
    %v19 = vld [vmem:[%s0 + $0x10] sm:$0xff]
    %v20 = vld [vmem:[%s0 + $0x18] sm:$0xff]
    %v21 = vld [vmem:[%s0 + $0x20] sm:$0xff]
    %v22 = vld [vmem:[%s0 + $0x28] sm:$0xff]
    %v23 = vld [vmem:[%s0 + $0x30] sm:$0xff]
    %v24 = vld [vmem:[%s0 + $0x38] sm:$0xff]
    %v25 = vld [vmem:[%s0 + $0x40] sm:$0xff]
    %v26 = vld [vmem:[%s0 + $0x48] sm:$0xff]
    %v27 = vld [vmem:[%s0 + $0x50] sm:$0xff]
    %v28 = vld [vmem:[%s0 + $0x58] sm:$0xff]
    %v29 = vld [vmem:[%s0 + $0x60] sm:$0xff]
    %v30 = vld [vmem:[%s0 + $0x68] sm:$0xff]
    %v31 = vld [vmem:[%s0 + $0x70] sm:$0xff]
    %v32 = vld [vmem:[%s0 + $0x78] sm:$0xff]
    %v33 = vadd.f32 %v17, %v18
    %34 = vadd.xlane.f32.xlu0 %v33
    %v35 = vpop.xlane.xlu0 %34
    %v36 = vadd.f32 %v19, %v20
    %37 = vadd.xlane.f32.xlu0 %v36
    %v38 = vpop.xlane.xlu0 %37
    %v39 = vadd.f32 %v21, %v22
    %40 = vadd.xlane.f32.xlu0 %v39
    %v41 = vpop.xlane.xlu0 %40
    %v42 = vadd.f32 %v23, %v24
    %43 = vadd.xlane.f32.xlu0 %v42
    %v44 = vpop.xlane.xlu0 %43
    %v45 = vadd.f32 %v25, %v26
    %46 = vadd.xlane.f32.xlu0 %v45
    %v47 = vpop.xlane.xlu0 %46
    %v48 = vadd.f32 %v27, %v28
    %49 = vadd.xlane.f32.xlu0 %v48
    %v50 = vpop.xlane.xlu0 %49
    %v51 = vadd.f32 %v29, %v30
    %52 = vadd.xlane.f32.xlu0 %v51
    %v53 = vpop.xlane.xlu0 %52
    %v54 = vadd.f32 %v31, %v32
    %55 = vadd.xlane.f32.xlu0 %v54
    %v56 = vpop.xlane.xlu0 %55
    %v57 = vadd.f32 %v35, 0.0
    %v58 = vadd.f32 %v38, 0.0
    %v59 = vadd.f32 %v41, 0.0
    %v60 = vadd.f32 %v44, 0.0
    %v61 = vadd.f32 %v47, 0.0
    %v62 = vadd.f32 %v50, 0.0
    %v63 = vadd.f32 %v53, 0.0
    %v64 = vadd.f32 %v56, 0.0
    %v65 = vmul.f32 %v57, 0.00390625
    %v66 = vmul.f32 %v58, 0.00390625
    %v67 = vmul.f32 %v59, 0.00390625
    %v68 = vmul.f32 %v60, 0.00390625
    %v69 = vmul.f32 %v61, 0.00390625
    %v70 = vmul.f32 %v62, 0.00390625
    %v71 = vmul.f32 %v63, 0.00390625
    %v72 = vmul.f32 %v64, 0.00390625
    %v73 = vld [vmem:[%s1] sm:$0x3]
    %v74 = vld [vmem:[%s2] sm:$0xff]
    %v75 = vld [vmem:[%s2 + $0x8] sm:$0xff]
    %v76 = vld [vmem:[%s2 + $0x10] sm:$0xff]
    %v77 = vld [vmem:[%s2 + $0x18] sm:$0xff]
    %v79 = vlaneseq
    %v80 = vshrl.u32 %v79, 7
    %v81 = vsub.s32 0, %v80
    %v82 = vrot.slane %v73, %v81
    %84 = vbcast.lane.b32.xlu0 %v82, 256
    %v85 = vpop.permute.xlu0 %84
    %s87 = sor.u32 256, 8
    %88 = vbcast.lane.b32.xlu0 %v82, %s87
    %v89 = vpop.permute.xlu0 %88
    %s91 = sor.u32 256, 16
    %92 = vbcast.lane.b32.xlu0 %v82, %s91
    %v93 = vpop.permute.xlu0 %92
    %s95 = sor.u32 256, 24
    %96 = vbcast.lane.b32.xlu0 %v82, %s95
    %v97 = vpop.permute.xlu0 %96
    %v98 = vlaneseq
    %v99 = vshrl.u32 %v98, 7
    %v100 = vsub.s32 1, %v99
    %v101 = vrot.slane %v73, %v100
    %103 = vbcast.lane.b32.xlu0 %v101, 256
    %v104 = vpop.permute.xlu0 %103
    %s106 = sor.u32 256, 8
    %107 = vbcast.lane.b32.xlu0 %v101, %s106
    %v108 = vpop.permute.xlu0 %107
    %s110 = sor.u32 256, 16
    %111 = vbcast.lane.b32.xlu0 %v101, %s110
    %v112 = vpop.permute.xlu0 %111
    %s114 = sor.u32 256, 24
    %115 = vbcast.lane.b32.xlu0 %v101, %s114
    %v116 = vpop.permute.xlu0 %115
    %v125 = vmul.f32 %v65, %v85
    %v126 = vmul.f32 %v66, %v89
    %v127 = vmul.f32 %v67, %v93
    %v128 = vmul.f32 %v68, %v97
    %v129 = vmul.f32 %v65, %v104
    %v130 = vmul.f32 %v66, %v108
    %v131 = vmul.f32 %v67, %v112
    %v132 = vmul.f32 %v68, %v116
    %v133 = vmul.f32 %v69, %v85
    %v134 = vmul.f32 %v70, %v89
    %v135 = vmul.f32 %v71, %v93
    %v136 = vmul.f32 %v72, %v97
    %v137 = vmul.f32 %v69, %v104
    %v138 = vmul.f32 %v70, %v108
    %v139 = vmul.f32 %v71, %v112
    %v140 = vmul.f32 %v72, %v116
    %157 = vset.pattern.permute.xlu0 0
    %158 = vperm.xlu0 %157, %v125
    %v159 = vpop.permute.xlu0 %158
    %160 = vset.pattern.permute.xlu0 0
    %161 = vperm.xlu0 %160, %v126
    %v162 = vpop.permute.xlu0 %161
    %163 = vset.pattern.permute.xlu0 0
    %164 = vperm.xlu0 %163, %v127
    %v165 = vpop.permute.xlu0 %164
    %166 = vset.pattern.permute.xlu0 0
    %167 = vperm.xlu0 %166, %v128
    %v168 = vpop.permute.xlu0 %167
    %169 = vset.pattern.permute.xlu0 0
    %170 = vperm.xlu0 %169, %v129
    %v171 = vpop.permute.xlu0 %170
    %172 = vset.pattern.permute.xlu0 0
    %173 = vperm.xlu0 %172, %v130
    %v174 = vpop.permute.xlu0 %173
    %175 = vset.pattern.permute.xlu0 0
    %176 = vperm.xlu0 %175, %v131
    %v177 = vpop.permute.xlu0 %176
    %178 = vset.pattern.permute.xlu0 0
    %179 = vperm.xlu0 %178, %v132
    %v180 = vpop.permute.xlu0 %179
    %181 = vset.pattern.permute.xlu0 0
    %182 = vperm.xlu0 %181, %v133
    %v183 = vpop.permute.xlu0 %182
    %184 = vset.pattern.permute.xlu0 0
    %185 = vperm.xlu0 %184, %v134
    %v186 = vpop.permute.xlu0 %185
    %187 = vset.pattern.permute.xlu0 0
    %188 = vperm.xlu0 %187, %v135
    %v189 = vpop.permute.xlu0 %188
    %190 = vset.pattern.permute.xlu0 0
    %191 = vperm.xlu0 %190, %v136
    %v192 = vpop.permute.xlu0 %191
    %193 = vset.pattern.permute.xlu0 0
    %194 = vperm.xlu0 %193, %v137
    %v195 = vpop.permute.xlu0 %194
    %196 = vset.pattern.permute.xlu0 0
    %197 = vperm.xlu0 %196, %v138
    %v198 = vpop.permute.xlu0 %197
    %199 = vset.pattern.permute.xlu0 0
    %200 = vperm.xlu0 %199, %v139
    %v201 = vpop.permute.xlu0 %200
    %202 = vset.pattern.permute.xlu0 0
    %203 = vperm.xlu0 %202, %v140
    %v204 = vpop.permute.xlu0 %203
    %v205 = vlaneseq
    %v206 = vand.u32 %v205, 127
    %v207 = vlaneseq
    %v208 = vshrl.u32 %v207, 7
    %v209 = vsub.s32 %v206, %v208
    %v210 = vrot.slane %v159, %v209
    %v211 = vadd.s32 %v206, 4294967288
    %v212 = vlaneseq
    %v213 = vshrl.u32 %v212, 7
    %v214 = vsub.s32 %v211, %v213
    %v215 = vrot.slane %v162, %v214
    %vm216 = vcmask 130112
    %v217 = vsel %vm216, %v215, %v210
    %v218 = vadd.s32 %v206, 4294967280
    %v219 = vlaneseq
    %v220 = vshrl.u32 %v219, 7
    %v221 = vsub.s32 %v218, %v220
    %v222 = vrot.slane %v165, %v221
    %vm223 = vcmask 195712
    %v224 = vsel %vm223, %v222, %v217
    %v225 = vadd.s32 %v206, 4294967272
    %v226 = vlaneseq
    %v227 = vshrl.u32 %v226, 7
    %v228 = vsub.s32 %v225, %v227
    %v229 = vrot.slane %v168, %v228
    %vm230 = vcmask 261312
    %v231 = vsel %vm230, %v229, %v224
    %v232 = vlaneseq
    %v233 = vshrl.u32 %v232, 7
    %v234 = vsub.s32 %v206, %v233
    %v235 = vrot.slane %v171, %v234
    %v236 = vlaneseq
    %v237 = vshrl.u32 %v236, 7
    %v238 = vsub.s32 %v211, %v237
    %v239 = vrot.slane %v174, %v238
    %v240 = vsel %vm216, %v239, %v235
    %v241 = vlaneseq
    %v242 = vshrl.u32 %v241, 7
    %v243 = vsub.s32 %v218, %v242
    %v244 = vrot.slane %v177, %v243
    %v245 = vsel %vm223, %v244, %v240
    %v246 = vlaneseq
    %v247 = vshrl.u32 %v246, 7
    %v248 = vsub.s32 %v225, %v247
    %v249 = vrot.slane %v180, %v248
    %v250 = vsel %vm230, %v249, %v245
    %v251 = vlaneseq
    %v252 = vshrl.u32 %v251, 7
    %v253 = vsub.s32 %v206, %v252
    %v254 = vrot.slane %v183, %v253
    %v255 = vlaneseq
    %v256 = vshrl.u32 %v255, 7
    %v257 = vsub.s32 %v211, %v256
    %v258 = vrot.slane %v186, %v257
    %v259 = vsel %vm216, %v258, %v254
    %v260 = vlaneseq
    %v261 = vshrl.u32 %v260, 7
    %v262 = vsub.s32 %v218, %v261
    %v263 = vrot.slane %v189, %v262
    %v264 = vsel %vm223, %v263, %v259
    %v265 = vlaneseq
    %v266 = vshrl.u32 %v265, 7
    %v267 = vsub.s32 %v225, %v266
    %v268 = vrot.slane %v192, %v267
    %v269 = vsel %vm230, %v268, %v264
    %v270 = vlaneseq
    %v271 = vshrl.u32 %v270, 7
    %v272 = vsub.s32 %v206, %v271
    %v273 = vrot.slane %v195, %v272
    %v274 = vlaneseq
    %v275 = vshrl.u32 %v274, 7
    %v276 = vsub.s32 %v211, %v275
    %v277 = vrot.slane %v198, %v276
    %v278 = vsel %vm216, %v277, %v273
    %v279 = vlaneseq
    %v280 = vshrl.u32 %v279, 7
    %v281 = vsub.s32 %v218, %v280
    %v282 = vrot.slane %v201, %v281
    %v283 = vsel %vm223, %v282, %v278
    %v284 = vlaneseq
    %v285 = vshrl.u32 %v284, 7
    %v286 = vsub.s32 %v225, %v285
    %v287 = vrot.slane %v204, %v286
    %v288 = vsel %vm230, %v287, %v283
    %vm289 = vcmask 1041409
    %v290 = vsel %vm289, %v250, %v231
    %v291 = vsel %vm289, %v288, %v269
    %vm294 = vcmask 254976
    %v295 = vsel %vm294, %v290, 0.0
    %296 = vadd.xlane.f32.xlu0 %v295
    %v297 = vpop.xlane.xlu0 %296
    %v298 = vsel %vm294, %v291, 0.0
    %299 = vadd.xlane.f32.xlu0 %v298
    %v300 = vpop.xlane.xlu0 %299
    %v301 = vmax.f32 %v297, 0.0
    %v302 = vmax.f32 %v300, 0.0
    %v307 = vlaneseq
    %v308 = vshrl.u32 %v307, 7
    %v309 = vsub.s32 0, %v308
    %v310 = vrot.slane %v74, %v309
    %312 = vbcast.lane.b32.xlu0 %v310, 256
    %v313 = vpop.permute.xlu0 %312
    %v314 = vlaneseq
    %v315 = vshrl.u32 %v314, 7
    %v316 = vsub.s32 1, %v315
    %v317 = vrot.slane %v74, %v316
    %319 = vbcast.lane.b32.xlu0 %v317, 256
    %v320 = vpop.permute.xlu0 %319
    %v321 = vlaneseq
    %v322 = vshrl.u32 %v321, 7
    %v323 = vsub.s32 2, %v322
    %v324 = vrot.slane %v74, %v323
    %326 = vbcast.lane.b32.xlu0 %v324, 256
    %v327 = vpop.permute.xlu0 %326
    %v328 = vlaneseq
    %v329 = vshrl.u32 %v328, 7
    %v330 = vsub.s32 3, %v329
    %v331 = vrot.slane %v74, %v330
    %333 = vbcast.lane.b32.xlu0 %v331, 256
    %v334 = vpop.permute.xlu0 %333
    %v335 = vlaneseq
    %v336 = vshrl.u32 %v335, 7
    %v337 = vsub.s32 4, %v336
    %v338 = vrot.slane %v74, %v337
    %340 = vbcast.lane.b32.xlu0 %v338, 256
    %v341 = vpop.permute.xlu0 %340
    %v342 = vlaneseq
    %v343 = vshrl.u32 %v342, 7
    %v344 = vsub.s32 5, %v343
    %v345 = vrot.slane %v74, %v344
    %347 = vbcast.lane.b32.xlu0 %v345, 256
    %v348 = vpop.permute.xlu0 %347
    %v349 = vlaneseq
    %v350 = vshrl.u32 %v349, 7
    %v351 = vsub.s32 6, %v350
    %v352 = vrot.slane %v74, %v351
    %354 = vbcast.lane.b32.xlu0 %v352, 256
    %v355 = vpop.permute.xlu0 %354
    %v356 = vlaneseq
    %v357 = vshrl.u32 %v356, 7
    %v358 = vsub.s32 7, %v357
    %v359 = vrot.slane %v74, %v358
    %361 = vbcast.lane.b32.xlu0 %v359, 256
    %v362 = vpop.permute.xlu0 %361
    %v363 = vlaneseq
    %v364 = vshrl.u32 %v363, 7
    %v365 = vsub.s32 0, %v364
    %v366 = vrot.slane %v75, %v365
    %368 = vbcast.lane.b32.xlu0 %v366, 256
    %v369 = vpop.permute.xlu0 %368
    %v370 = vlaneseq
    %v371 = vshrl.u32 %v370, 7
    %v372 = vsub.s32 1, %v371
    %v373 = vrot.slane %v75, %v372
    %375 = vbcast.lane.b32.xlu0 %v373, 256
    %v376 = vpop.permute.xlu0 %375
    %v377 = vlaneseq
    %v378 = vshrl.u32 %v377, 7
    %v379 = vsub.s32 2, %v378
    %v380 = vrot.slane %v75, %v379
    %382 = vbcast.lane.b32.xlu0 %v380, 256
    %v383 = vpop.permute.xlu0 %382
    %v384 = vlaneseq
    %v385 = vshrl.u32 %v384, 7
    %v386 = vsub.s32 3, %v385
    %v387 = vrot.slane %v75, %v386
    %389 = vbcast.lane.b32.xlu0 %v387, 256
    %v390 = vpop.permute.xlu0 %389
    %v391 = vlaneseq
    %v392 = vshrl.u32 %v391, 7
    %v393 = vsub.s32 4, %v392
    %v394 = vrot.slane %v75, %v393
    %396 = vbcast.lane.b32.xlu0 %v394, 256
    %v397 = vpop.permute.xlu0 %396
    %v398 = vlaneseq
    %v399 = vshrl.u32 %v398, 7
    %v400 = vsub.s32 5, %v399
    %v401 = vrot.slane %v75, %v400
    %403 = vbcast.lane.b32.xlu0 %v401, 256
    %v404 = vpop.permute.xlu0 %403
    %v405 = vlaneseq
    %v406 = vshrl.u32 %v405, 7
    %v407 = vsub.s32 6, %v406
    %v408 = vrot.slane %v75, %v407
    %410 = vbcast.lane.b32.xlu0 %v408, 256
    %v411 = vpop.permute.xlu0 %410
    %v412 = vlaneseq
    %v413 = vshrl.u32 %v412, 7
    %v414 = vsub.s32 7, %v413
    %v415 = vrot.slane %v75, %v414
    %417 = vbcast.lane.b32.xlu0 %v415, 256
    %v418 = vpop.permute.xlu0 %417
    %v419 = vlaneseq
    %v420 = vshrl.u32 %v419, 7
    %v421 = vsub.s32 0, %v420
    %v422 = vrot.slane %v76, %v421
    %424 = vbcast.lane.b32.xlu0 %v422, 256
    %v425 = vpop.permute.xlu0 %424
    %v426 = vlaneseq
    %v427 = vshrl.u32 %v426, 7
    %v428 = vsub.s32 1, %v427
    %v429 = vrot.slane %v76, %v428
    %431 = vbcast.lane.b32.xlu0 %v429, 256
    %v432 = vpop.permute.xlu0 %431
    %v433 = vlaneseq
    %v434 = vshrl.u32 %v433, 7
    %v435 = vsub.s32 2, %v434
    %v436 = vrot.slane %v76, %v435
    %438 = vbcast.lane.b32.xlu0 %v436, 256
    %v439 = vpop.permute.xlu0 %438
    %v440 = vlaneseq
    %v441 = vshrl.u32 %v440, 7
    %v442 = vsub.s32 3, %v441
    %v443 = vrot.slane %v76, %v442
    %445 = vbcast.lane.b32.xlu0 %v443, 256
    %v446 = vpop.permute.xlu0 %445
    %v447 = vlaneseq
    %v448 = vshrl.u32 %v447, 7
    %v449 = vsub.s32 4, %v448
    %v450 = vrot.slane %v76, %v449
    %452 = vbcast.lane.b32.xlu0 %v450, 256
    %v453 = vpop.permute.xlu0 %452
    %v454 = vlaneseq
    %v455 = vshrl.u32 %v454, 7
    %v456 = vsub.s32 5, %v455
    %v457 = vrot.slane %v76, %v456
    %459 = vbcast.lane.b32.xlu0 %v457, 256
    %v460 = vpop.permute.xlu0 %459
    %v461 = vlaneseq
    %v462 = vshrl.u32 %v461, 7
    %v463 = vsub.s32 6, %v462
    %v464 = vrot.slane %v76, %v463
    %466 = vbcast.lane.b32.xlu0 %v464, 256
    %v467 = vpop.permute.xlu0 %466
    %v468 = vlaneseq
    %v469 = vshrl.u32 %v468, 7
    %v470 = vsub.s32 7, %v469
    %v471 = vrot.slane %v76, %v470
    %473 = vbcast.lane.b32.xlu0 %v471, 256
    %v474 = vpop.permute.xlu0 %473
    %v475 = vlaneseq
    %v476 = vshrl.u32 %v475, 7
    %v477 = vsub.s32 0, %v476
    %v478 = vrot.slane %v77, %v477
    %480 = vbcast.lane.b32.xlu0 %v478, 256
    %v481 = vpop.permute.xlu0 %480
    %v482 = vlaneseq
    %v483 = vshrl.u32 %v482, 7
    %v484 = vsub.s32 1, %v483
    %v485 = vrot.slane %v77, %v484
    %487 = vbcast.lane.b32.xlu0 %v485, 256
    %v488 = vpop.permute.xlu0 %487
    %v489 = vlaneseq
    %v490 = vshrl.u32 %v489, 7
    %v491 = vsub.s32 2, %v490
    %v492 = vrot.slane %v77, %v491
    %494 = vbcast.lane.b32.xlu0 %v492, 256
    %v495 = vpop.permute.xlu0 %494
    %v496 = vlaneseq
    %v497 = vshrl.u32 %v496, 7
    %v498 = vsub.s32 3, %v497
    %v499 = vrot.slane %v77, %v498
    %501 = vbcast.lane.b32.xlu0 %v499, 256
    %v502 = vpop.permute.xlu0 %501
    %v503 = vlaneseq
    %v504 = vshrl.u32 %v503, 7
    %v505 = vsub.s32 4, %v504
    %v506 = vrot.slane %v77, %v505
    %508 = vbcast.lane.b32.xlu0 %v506, 256
    %v509 = vpop.permute.xlu0 %508
    %v510 = vlaneseq
    %v511 = vshrl.u32 %v510, 7
    %v512 = vsub.s32 5, %v511
    %v513 = vrot.slane %v77, %v512
    %515 = vbcast.lane.b32.xlu0 %v513, 256
    %v516 = vpop.permute.xlu0 %515
    %v517 = vlaneseq
    %v518 = vshrl.u32 %v517, 7
    %v519 = vsub.s32 6, %v518
    %v520 = vrot.slane %v77, %v519
    %522 = vbcast.lane.b32.xlu0 %v520, 256
    %v523 = vpop.permute.xlu0 %522
    %v524 = vlaneseq
    %v525 = vshrl.u32 %v524, 7
    %v526 = vsub.s32 7, %v525
    %v527 = vrot.slane %v77, %v526
    %529 = vbcast.lane.b32.xlu0 %v527, 256
    %v530 = vpop.permute.xlu0 %529
    %v563 = vmul.f32 %v301, %v313
    %v564 = vmul.f32 %v301, %v320
    %v565 = vmul.f32 %v301, %v327
    %v566 = vmul.f32 %v301, %v334
    %v567 = vmul.f32 %v301, %v341
    %v568 = vmul.f32 %v301, %v348
    %v569 = vmul.f32 %v301, %v355
    %v570 = vmul.f32 %v301, %v362
    %v571 = vmul.f32 %v301, %v369
    %v572 = vmul.f32 %v301, %v376
    %v573 = vmul.f32 %v301, %v383
    %v574 = vmul.f32 %v301, %v390
    %v575 = vmul.f32 %v301, %v397
    %v576 = vmul.f32 %v301, %v404
    %v577 = vmul.f32 %v301, %v411
    %v578 = vmul.f32 %v301, %v418
    %v579 = vmul.f32 %v301, %v425
    %v580 = vmul.f32 %v301, %v432
    %v581 = vmul.f32 %v301, %v439
    %v582 = vmul.f32 %v301, %v446
    %v583 = vmul.f32 %v301, %v453
    %v584 = vmul.f32 %v301, %v460
    %v585 = vmul.f32 %v301, %v467
    %v586 = vmul.f32 %v301, %v474
    %v587 = vmul.f32 %v301, %v481
    %v588 = vmul.f32 %v301, %v488
    %v589 = vmul.f32 %v301, %v495
    %v590 = vmul.f32 %v301, %v502
    %v591 = vmul.f32 %v301, %v509
    %v592 = vmul.f32 %v301, %v516
    %v593 = vmul.f32 %v301, %v523
    %v594 = vmul.f32 %v301, %v530
    %v595 = vmul.f32 %v302, %v313
    %v596 = vmul.f32 %v302, %v320
    %v597 = vmul.f32 %v302, %v327
    %v598 = vmul.f32 %v302, %v334
    %v599 = vmul.f32 %v302, %v341
    %v600 = vmul.f32 %v302, %v348
    %v601 = vmul.f32 %v302, %v355
    %v602 = vmul.f32 %v302, %v362
    %v603 = vmul.f32 %v302, %v369
    %v604 = vmul.f32 %v302, %v376
    %v605 = vmul.f32 %v302, %v383
    %v606 = vmul.f32 %v302, %v390
    %v607 = vmul.f32 %v302, %v397
    %v608 = vmul.f32 %v302, %v404
    %v609 = vmul.f32 %v302, %v411
    %v610 = vmul.f32 %v302, %v418
    %v611 = vmul.f32 %v302, %v425
    %v612 = vmul.f32 %v302, %v432
    %v613 = vmul.f32 %v302, %v439
    %v614 = vmul.f32 %v302, %v446
    %v615 = vmul.f32 %v302, %v453
    %v616 = vmul.f32 %v302, %v460
    %v617 = vmul.f32 %v302, %v467
    %v618 = vmul.f32 %v302, %v474
    %v619 = vmul.f32 %v302, %v481
    %v620 = vmul.f32 %v302, %v488
    %v621 = vmul.f32 %v302, %v495
    %v622 = vmul.f32 %v302, %v502
    %v623 = vmul.f32 %v302, %v509
    %v624 = vmul.f32 %v302, %v516
    %v625 = vmul.f32 %v302, %v523
    %v626 = vmul.f32 %v302, %v530
    %691 = vset.pattern.permute.xlu0 0
    %692 = vperm.xlu0 %691, %v563
    %v693 = vpop.permute.xlu0 %692
    %694 = vset.pattern.permute.xlu0 0
    %695 = vperm.xlu0 %694, %v564
    %v696 = vpop.permute.xlu0 %695
    %697 = vset.pattern.permute.xlu0 0
    %698 = vperm.xlu0 %697, %v565
    %v699 = vpop.permute.xlu0 %698
    %700 = vset.pattern.permute.xlu0 0
    %701 = vperm.xlu0 %700, %v566
    %v702 = vpop.permute.xlu0 %701
    %703 = vset.pattern.permute.xlu0 0
    %704 = vperm.xlu0 %703, %v567
    %v705 = vpop.permute.xlu0 %704
    %706 = vset.pattern.permute.xlu0 0
    %707 = vperm.xlu0 %706, %v568
    %v708 = vpop.permute.xlu0 %707
    %709 = vset.pattern.permute.xlu0 0
    %710 = vperm.xlu0 %709, %v569
    %v711 = vpop.permute.xlu0 %710
    %712 = vset.pattern.permute.xlu0 0
    %713 = vperm.xlu0 %712, %v570
    %v714 = vpop.permute.xlu0 %713
    %715 = vset.pattern.permute.xlu0 0
    %716 = vperm.xlu0 %715, %v571
    %v717 = vpop.permute.xlu0 %716
    %718 = vset.pattern.permute.xlu0 0
    %719 = vperm.xlu0 %718, %v572
    %v720 = vpop.permute.xlu0 %719
    %721 = vset.pattern.permute.xlu0 0
    %722 = vperm.xlu0 %721, %v573
    %v723 = vpop.permute.xlu0 %722
    %724 = vset.pattern.permute.xlu0 0
    %725 = vperm.xlu0 %724, %v574
    %v726 = vpop.permute.xlu0 %725
    %727 = vset.pattern.permute.xlu0 0
    %728 = vperm.xlu0 %727, %v575
    %v729 = vpop.permute.xlu0 %728
    %730 = vset.pattern.permute.xlu0 0
    %731 = vperm.xlu0 %730, %v576
    %v732 = vpop.permute.xlu0 %731
    %733 = vset.pattern.permute.xlu0 0
    %734 = vperm.xlu0 %733, %v577
    %v735 = vpop.permute.xlu0 %734
    %736 = vset.pattern.permute.xlu0 0
    %737 = vperm.xlu0 %736, %v578
    %v738 = vpop.permute.xlu0 %737
    %739 = vset.pattern.permute.xlu0 0
    %740 = vperm.xlu0 %739, %v579
    %v741 = vpop.permute.xlu0 %740
    %742 = vset.pattern.permute.xlu0 0
    %743 = vperm.xlu0 %742, %v580
    %v744 = vpop.permute.xlu0 %743
    %745 = vset.pattern.permute.xlu0 0
    %746 = vperm.xlu0 %745, %v581
    %v747 = vpop.permute.xlu0 %746
    %748 = vset.pattern.permute.xlu0 0
    %749 = vperm.xlu0 %748, %v582
    %v750 = vpop.permute.xlu0 %749
    %751 = vset.pattern.permute.xlu0 0
    %752 = vperm.xlu0 %751, %v583
    %v753 = vpop.permute.xlu0 %752
    %754 = vset.pattern.permute.xlu0 0
    %755 = vperm.xlu0 %754, %v584
    %v756 = vpop.permute.xlu0 %755
    %757 = vset.pattern.permute.xlu0 0
    %758 = vperm.xlu0 %757, %v585
    %v759 = vpop.permute.xlu0 %758
    %760 = vset.pattern.permute.xlu0 0
    %761 = vperm.xlu0 %760, %v586
    %v762 = vpop.permute.xlu0 %761
    %763 = vset.pattern.permute.xlu0 0
    %764 = vperm.xlu0 %763, %v587
    %v765 = vpop.permute.xlu0 %764
    %766 = vset.pattern.permute.xlu0 0
    %767 = vperm.xlu0 %766, %v588
    %v768 = vpop.permute.xlu0 %767
    %769 = vset.pattern.permute.xlu0 0
    %770 = vperm.xlu0 %769, %v589
    %v771 = vpop.permute.xlu0 %770
    %772 = vset.pattern.permute.xlu0 0
    %773 = vperm.xlu0 %772, %v590
    %v774 = vpop.permute.xlu0 %773
    %775 = vset.pattern.permute.xlu0 0
    %776 = vperm.xlu0 %775, %v591
    %v777 = vpop.permute.xlu0 %776
    %778 = vset.pattern.permute.xlu0 0
    %779 = vperm.xlu0 %778, %v592
    %v780 = vpop.permute.xlu0 %779
    %781 = vset.pattern.permute.xlu0 0
    %782 = vperm.xlu0 %781, %v593
    %v783 = vpop.permute.xlu0 %782
    %784 = vset.pattern.permute.xlu0 0
    %785 = vperm.xlu0 %784, %v594
    %v786 = vpop.permute.xlu0 %785
    %787 = vset.pattern.permute.xlu0 0
    %788 = vperm.xlu0 %787, %v595
    %v789 = vpop.permute.xlu0 %788
    %790 = vset.pattern.permute.xlu0 0
    %791 = vperm.xlu0 %790, %v596
    %v792 = vpop.permute.xlu0 %791
    %793 = vset.pattern.permute.xlu0 0
    %794 = vperm.xlu0 %793, %v597
    %v795 = vpop.permute.xlu0 %794
    %796 = vset.pattern.permute.xlu0 0
    %797 = vperm.xlu0 %796, %v598
    %v798 = vpop.permute.xlu0 %797
    %799 = vset.pattern.permute.xlu0 0
    %800 = vperm.xlu0 %799, %v599
    %v801 = vpop.permute.xlu0 %800
    %802 = vset.pattern.permute.xlu0 0
    %803 = vperm.xlu0 %802, %v600
    %v804 = vpop.permute.xlu0 %803
    %805 = vset.pattern.permute.xlu0 0
    %806 = vperm.xlu0 %805, %v601
    %v807 = vpop.permute.xlu0 %806
    %808 = vset.pattern.permute.xlu0 0
    %809 = vperm.xlu0 %808, %v602
    %v810 = vpop.permute.xlu0 %809
    %811 = vset.pattern.permute.xlu0 0
    %812 = vperm.xlu0 %811, %v603
    %v813 = vpop.permute.xlu0 %812
    %814 = vset.pattern.permute.xlu0 0
    %815 = vperm.xlu0 %814, %v604
    %v816 = vpop.permute.xlu0 %815
    %817 = vset.pattern.permute.xlu0 0
    %818 = vperm.xlu0 %817, %v605
    %v819 = vpop.permute.xlu0 %818
    %820 = vset.pattern.permute.xlu0 0
    %821 = vperm.xlu0 %820, %v606
    %v822 = vpop.permute.xlu0 %821
    %823 = vset.pattern.permute.xlu0 0
    %824 = vperm.xlu0 %823, %v607
    %v825 = vpop.permute.xlu0 %824
    %826 = vset.pattern.permute.xlu0 0
    %827 = vperm.xlu0 %826, %v608
    %v828 = vpop.permute.xlu0 %827
    %829 = vset.pattern.permute.xlu0 0
    %830 = vperm.xlu0 %829, %v609
    %v831 = vpop.permute.xlu0 %830
    %832 = vset.pattern.permute.xlu0 0
    %833 = vperm.xlu0 %832, %v610
    %v834 = vpop.permute.xlu0 %833
    %835 = vset.pattern.permute.xlu0 0
    %836 = vperm.xlu0 %835, %v611
    %v837 = vpop.permute.xlu0 %836
    %838 = vset.pattern.permute.xlu0 0
    %839 = vperm.xlu0 %838, %v612
    %v840 = vpop.permute.xlu0 %839
    %841 = vset.pattern.permute.xlu0 0
    %842 = vperm.xlu0 %841, %v613
    %v843 = vpop.permute.xlu0 %842
    %844 = vset.pattern.permute.xlu0 0
    %845 = vperm.xlu0 %844, %v614
    %v846 = vpop.permute.xlu0 %845
    %847 = vset.pattern.permute.xlu0 0
    %848 = vperm.xlu0 %847, %v615
    %v849 = vpop.permute.xlu0 %848
    %850 = vset.pattern.permute.xlu0 0
    %851 = vperm.xlu0 %850, %v616
    %v852 = vpop.permute.xlu0 %851
    %853 = vset.pattern.permute.xlu0 0
    %854 = vperm.xlu0 %853, %v617
    %v855 = vpop.permute.xlu0 %854
    %856 = vset.pattern.permute.xlu0 0
    %857 = vperm.xlu0 %856, %v618
    %v858 = vpop.permute.xlu0 %857
    %859 = vset.pattern.permute.xlu0 0
    %860 = vperm.xlu0 %859, %v619
    %v861 = vpop.permute.xlu0 %860
    %862 = vset.pattern.permute.xlu0 0
    %863 = vperm.xlu0 %862, %v620
    %v864 = vpop.permute.xlu0 %863
    %865 = vset.pattern.permute.xlu0 0
    %866 = vperm.xlu0 %865, %v621
    %v867 = vpop.permute.xlu0 %866
    %868 = vset.pattern.permute.xlu0 0
    %869 = vperm.xlu0 %868, %v622
    %v870 = vpop.permute.xlu0 %869
    %871 = vset.pattern.permute.xlu0 0
    %872 = vperm.xlu0 %871, %v623
    %v873 = vpop.permute.xlu0 %872
    %874 = vset.pattern.permute.xlu0 0
    %875 = vperm.xlu0 %874, %v624
    %v876 = vpop.permute.xlu0 %875
    %877 = vset.pattern.permute.xlu0 0
    %878 = vperm.xlu0 %877, %v625
    %v879 = vpop.permute.xlu0 %878
    %880 = vset.pattern.permute.xlu0 0
    %881 = vperm.xlu0 %880, %v626
    %v882 = vpop.permute.xlu0 %881
    %v883 = vlaneseq
    %v884 = vshrl.u32 %v883, 7
    %v885 = vsub.s32 %v206, %v884
    %v886 = vrot.slane %v693, %v885
    %v887 = vlaneseq
    %v888 = vshrl.u32 %v887, 7
    %v889 = vsub.s32 %v206, %v888
    %v890 = vrot.slane %v696, %v889
    %v891 = vlaneseq
    %v892 = vshrl.u32 %v891, 7
    %v893 = vsub.s32 %v206, %v892
    %v894 = vrot.slane %v699, %v893
    %v895 = vlaneseq
    %v896 = vshrl.u32 %v895, 7
    %v897 = vsub.s32 %v206, %v896
    %v898 = vrot.slane %v702, %v897
    %v899 = vlaneseq
    %v900 = vshrl.u32 %v899, 7
    %v901 = vsub.s32 %v206, %v900
    %v902 = vrot.slane %v705, %v901
    %v903 = vlaneseq
    %v904 = vshrl.u32 %v903, 7
    %v905 = vsub.s32 %v206, %v904
    %v906 = vrot.slane %v708, %v905
    %v907 = vlaneseq
    %v908 = vshrl.u32 %v907, 7
    %v909 = vsub.s32 %v206, %v908
    %v910 = vrot.slane %v711, %v909
    %v911 = vlaneseq
    %v912 = vshrl.u32 %v911, 7
    %v913 = vsub.s32 %v206, %v912
    %v914 = vrot.slane %v714, %v913
    %v915 = vlaneseq
    %v916 = vshrl.u32 %v915, 7
    %v917 = vsub.s32 %v206, %v916
    %v918 = vrot.slane %v717, %v917
    %v919 = vlaneseq
    %v920 = vshrl.u32 %v919, 7
    %v921 = vsub.s32 %v206, %v920
    %v922 = vrot.slane %v720, %v921
    %v923 = vlaneseq
    %v924 = vshrl.u32 %v923, 7
    %v925 = vsub.s32 %v206, %v924
    %v926 = vrot.slane %v723, %v925
    %v927 = vlaneseq
    %v928 = vshrl.u32 %v927, 7
    %v929 = vsub.s32 %v206, %v928
    %v930 = vrot.slane %v726, %v929
    %v931 = vlaneseq
    %v932 = vshrl.u32 %v931, 7
    %v933 = vsub.s32 %v206, %v932
    %v934 = vrot.slane %v729, %v933
    %v935 = vlaneseq
    %v936 = vshrl.u32 %v935, 7
    %v937 = vsub.s32 %v206, %v936
    %v938 = vrot.slane %v732, %v937
    %v939 = vlaneseq
    %v940 = vshrl.u32 %v939, 7
    %v941 = vsub.s32 %v206, %v940
    %v942 = vrot.slane %v735, %v941
    %v943 = vlaneseq
    %v944 = vshrl.u32 %v943, 7
    %v945 = vsub.s32 %v206, %v944
    %v946 = vrot.slane %v738, %v945
    %v947 = vlaneseq
    %v948 = vshrl.u32 %v947, 7
    %v949 = vsub.s32 %v206, %v948
    %v950 = vrot.slane %v741, %v949
    %v951 = vlaneseq
    %v952 = vshrl.u32 %v951, 7
    %v953 = vsub.s32 %v206, %v952
    %v954 = vrot.slane %v744, %v953
    %v955 = vlaneseq
    %v956 = vshrl.u32 %v955, 7
    %v957 = vsub.s32 %v206, %v956
    %v958 = vrot.slane %v747, %v957
    %v959 = vlaneseq
    %v960 = vshrl.u32 %v959, 7
    %v961 = vsub.s32 %v206, %v960
    %v962 = vrot.slane %v750, %v961
    %v963 = vlaneseq
    %v964 = vshrl.u32 %v963, 7
    %v965 = vsub.s32 %v206, %v964
    %v966 = vrot.slane %v753, %v965
    %v967 = vlaneseq
    %v968 = vshrl.u32 %v967, 7
    %v969 = vsub.s32 %v206, %v968
    %v970 = vrot.slane %v756, %v969
    %v971 = vlaneseq
    %v972 = vshrl.u32 %v971, 7
    %v973 = vsub.s32 %v206, %v972
    %v974 = vrot.slane %v759, %v973
    %v975 = vlaneseq
    %v976 = vshrl.u32 %v975, 7
    %v977 = vsub.s32 %v206, %v976
    %v978 = vrot.slane %v762, %v977
    %v979 = vlaneseq
    %v980 = vshrl.u32 %v979, 7
    %v981 = vsub.s32 %v206, %v980
    %v982 = vrot.slane %v765, %v981
    %v983 = vlaneseq
    %v984 = vshrl.u32 %v983, 7
    %v985 = vsub.s32 %v206, %v984
    %v986 = vrot.slane %v768, %v985
    %v987 = vlaneseq
    %v988 = vshrl.u32 %v987, 7
    %v989 = vsub.s32 %v206, %v988
    %v990 = vrot.slane %v771, %v989
    %v991 = vlaneseq
    %v992 = vshrl.u32 %v991, 7
    %v993 = vsub.s32 %v206, %v992
    %v994 = vrot.slane %v774, %v993
    %v995 = vlaneseq
    %v996 = vshrl.u32 %v995, 7
    %v997 = vsub.s32 %v206, %v996
    %v998 = vrot.slane %v777, %v997
    %v999 = vlaneseq
    %v1000 = vshrl.u32 %v999, 7
    %v1001 = vsub.s32 %v206, %v1000
    %v1002 = vrot.slane %v780, %v1001
    %v1003 = vlaneseq
    %v1004 = vshrl.u32 %v1003, 7
    %v1005 = vsub.s32 %v206, %v1004
    %v1006 = vrot.slane %v783, %v1005
    %v1007 = vlaneseq
    %v1008 = vshrl.u32 %v1007, 7
    %v1009 = vsub.s32 %v206, %v1008
    %v1010 = vrot.slane %v786, %v1009
    %v1011 = vlaneseq
    %v1012 = vshrl.u32 %v1011, 7
    %v1013 = vsub.s32 %v206, %v1012
    %v1014 = vrot.slane %v789, %v1013
    %v1015 = vlaneseq
    %v1016 = vshrl.u32 %v1015, 7
    %v1017 = vsub.s32 %v206, %v1016
    %v1018 = vrot.slane %v792, %v1017
    %v1019 = vlaneseq
    %v1020 = vshrl.u32 %v1019, 7
    %v1021 = vsub.s32 %v206, %v1020
    %v1022 = vrot.slane %v795, %v1021
    %v1023 = vlaneseq
    %v1024 = vshrl.u32 %v1023, 7
    %v1025 = vsub.s32 %v206, %v1024
    %v1026 = vrot.slane %v798, %v1025
    %v1027 = vlaneseq
    %v1028 = vshrl.u32 %v1027, 7
    %v1029 = vsub.s32 %v206, %v1028
    %v1030 = vrot.slane %v801, %v1029
    %v1031 = vlaneseq
    %v1032 = vshrl.u32 %v1031, 7
    %v1033 = vsub.s32 %v206, %v1032
    %v1034 = vrot.slane %v804, %v1033
    %v1035 = vlaneseq
    %v1036 = vshrl.u32 %v1035, 7
    %v1037 = vsub.s32 %v206, %v1036
    %v1038 = vrot.slane %v807, %v1037
    %v1039 = vlaneseq
    %v1040 = vshrl.u32 %v1039, 7
    %v1041 = vsub.s32 %v206, %v1040
    %v1042 = vrot.slane %v810, %v1041
    %v1043 = vlaneseq
    %v1044 = vshrl.u32 %v1043, 7
    %v1045 = vsub.s32 %v206, %v1044
    %v1046 = vrot.slane %v813, %v1045
    %v1047 = vlaneseq
    %v1048 = vshrl.u32 %v1047, 7
    %v1049 = vsub.s32 %v206, %v1048
    %v1050 = vrot.slane %v816, %v1049
    %v1051 = vlaneseq
    %v1052 = vshrl.u32 %v1051, 7
    %v1053 = vsub.s32 %v206, %v1052
    %v1054 = vrot.slane %v819, %v1053
    %v1055 = vlaneseq
    %v1056 = vshrl.u32 %v1055, 7
    %v1057 = vsub.s32 %v206, %v1056
    %v1058 = vrot.slane %v822, %v1057
    %v1059 = vlaneseq
    %v1060 = vshrl.u32 %v1059, 7
    %v1061 = vsub.s32 %v206, %v1060
    %v1062 = vrot.slane %v825, %v1061
    %v1063 = vlaneseq
    %v1064 = vshrl.u32 %v1063, 7
    %v1065 = vsub.s32 %v206, %v1064
    %v1066 = vrot.slane %v828, %v1065
    %v1067 = vlaneseq
    %v1068 = vshrl.u32 %v1067, 7
    %v1069 = vsub.s32 %v206, %v1068
    %v1070 = vrot.slane %v831, %v1069
    %v1071 = vlaneseq
    %v1072 = vshrl.u32 %v1071, 7
    %v1073 = vsub.s32 %v206, %v1072
    %v1074 = vrot.slane %v834, %v1073
    %v1075 = vlaneseq
    %v1076 = vshrl.u32 %v1075, 7
    %v1077 = vsub.s32 %v206, %v1076
    %v1078 = vrot.slane %v837, %v1077
    %v1079 = vlaneseq
    %v1080 = vshrl.u32 %v1079, 7
    %v1081 = vsub.s32 %v206, %v1080
    %v1082 = vrot.slane %v840, %v1081
    %v1083 = vlaneseq
    %v1084 = vshrl.u32 %v1083, 7
    %v1085 = vsub.s32 %v206, %v1084
    %v1086 = vrot.slane %v843, %v1085
    %v1087 = vlaneseq
    %v1088 = vshrl.u32 %v1087, 7
    %v1089 = vsub.s32 %v206, %v1088
    %v1090 = vrot.slane %v846, %v1089
    %v1091 = vlaneseq
    %v1092 = vshrl.u32 %v1091, 7
    %v1093 = vsub.s32 %v206, %v1092
    %v1094 = vrot.slane %v849, %v1093
    %v1095 = vlaneseq
    %v1096 = vshrl.u32 %v1095, 7
    %v1097 = vsub.s32 %v206, %v1096
    %v1098 = vrot.slane %v852, %v1097
    %v1099 = vlaneseq
    %v1100 = vshrl.u32 %v1099, 7
    %v1101 = vsub.s32 %v206, %v1100
    %v1102 = vrot.slane %v855, %v1101
    %v1103 = vlaneseq
    %v1104 = vshrl.u32 %v1103, 7
    %v1105 = vsub.s32 %v206, %v1104
    %v1106 = vrot.slane %v858, %v1105
    %v1107 = vlaneseq
    %v1108 = vshrl.u32 %v1107, 7
    %v1109 = vsub.s32 %v206, %v1108
    %v1110 = vrot.slane %v861, %v1109
    %v1111 = vlaneseq
    %v1112 = vshrl.u32 %v1111, 7
    %v1113 = vsub.s32 %v206, %v1112
    %v1114 = vrot.slane %v864, %v1113
    %v1115 = vlaneseq
    %v1116 = vshrl.u32 %v1115, 7
    %v1117 = vsub.s32 %v206, %v1116
    %v1118 = vrot.slane %v867, %v1117
    %v1119 = vlaneseq
    %v1120 = vshrl.u32 %v1119, 7
    %v1121 = vsub.s32 %v206, %v1120
    %v1122 = vrot.slane %v870, %v1121
    %v1123 = vlaneseq
    %v1124 = vshrl.u32 %v1123, 7
    %v1125 = vsub.s32 %v206, %v1124
    %v1126 = vrot.slane %v873, %v1125
    %v1127 = vlaneseq
    %v1128 = vshrl.u32 %v1127, 7
    %v1129 = vsub.s32 %v206, %v1128
    %v1130 = vrot.slane %v876, %v1129
    %v1131 = vlaneseq
    %v1132 = vshrl.u32 %v1131, 7
    %v1133 = vsub.s32 %v206, %v1132
    %v1134 = vrot.slane %v879, %v1133
    %v1135 = vlaneseq
    %v1136 = vshrl.u32 %v1135, 7
    %v1137 = vsub.s32 %v206, %v1136
    %v1138 = vrot.slane %v882, %v1137
    %v1139 = vsel %vm289, %v890, %v886
    %vm1140 = vcmask 1042434
    %v1141 = vsel %vm1140, %v894, %v1139
    %vm1142 = vcmask 1043459
    %v1143 = vsel %vm1142, %v898, %v1141
    %vm1144 = vcmask 1044484
    %v1145 = vsel %vm1144, %v902, %v1143
    %vm1146 = vcmask 1045509
    %v1147 = vsel %vm1146, %v906, %v1145
    %vm1148 = vcmask 1046534
    %v1149 = vsel %vm1148, %v910, %v1147
    %vm1150 = vcmask 1047559
    %v1151 = vsel %vm1150, %v914, %v1149
    %v1152 = vsel %vm289, %v922, %v918
    %v1153 = vsel %vm1140, %v926, %v1152
    %v1154 = vsel %vm1142, %v930, %v1153
    %v1155 = vsel %vm1144, %v934, %v1154
    %v1156 = vsel %vm1146, %v938, %v1155
    %v1157 = vsel %vm1148, %v942, %v1156
    %v1158 = vsel %vm1150, %v946, %v1157
    %v1159 = vsel %vm289, %v954, %v950
    %v1160 = vsel %vm1140, %v958, %v1159
    %v1161 = vsel %vm1142, %v962, %v1160
    %v1162 = vsel %vm1144, %v966, %v1161
    %v1163 = vsel %vm1146, %v970, %v1162
    %v1164 = vsel %vm1148, %v974, %v1163
    %v1165 = vsel %vm1150, %v978, %v1164
    %v1166 = vsel %vm289, %v986, %v982
    %v1167 = vsel %vm1140, %v990, %v1166
    %v1168 = vsel %vm1142, %v994, %v1167
    %v1169 = vsel %vm1144, %v998, %v1168
    %v1170 = vsel %vm1146, %v1002, %v1169
    %v1171 = vsel %vm1148, %v1006, %v1170
    %v1172 = vsel %vm1150, %v1010, %v1171
    %v1173 = vsel %vm289, %v1018, %v1014
    %v1174 = vsel %vm1140, %v1022, %v1173
    %v1175 = vsel %vm1142, %v1026, %v1174
    %v1176 = vsel %vm1144, %v1030, %v1175
    %v1177 = vsel %vm1146, %v1034, %v1176
    %v1178 = vsel %vm1148, %v1038, %v1177
    %v1179 = vsel %vm1150, %v1042, %v1178
    %v1180 = vsel %vm289, %v1050, %v1046
    %v1181 = vsel %vm1140, %v1054, %v1180
    %v1182 = vsel %vm1142, %v1058, %v1181
    %v1183 = vsel %vm1144, %v1062, %v1182
    %v1184 = vsel %vm1146, %v1066, %v1183
    %v1185 = vsel %vm1148, %v1070, %v1184
    %v1186 = vsel %vm1150, %v1074, %v1185
    %v1187 = vsel %vm289, %v1082, %v1078
    %v1188 = vsel %vm1140, %v1086, %v1187
    %v1189 = vsel %vm1142, %v1090, %v1188
    %v1190 = vsel %vm1144, %v1094, %v1189
    %v1191 = vsel %vm1146, %v1098, %v1190
    %v1192 = vsel %vm1148, %v1102, %v1191
    %v1193 = vsel %vm1150, %v1106, %v1192
    %v1194 = vsel %vm289, %v1114, %v1110
    %v1195 = vsel %vm1140, %v1118, %v1194
    %v1196 = vsel %vm1142, %v1122, %v1195
    %v1197 = vsel %vm1144, %v1126, %v1196
    %v1198 = vsel %vm1146, %v1130, %v1197
    %v1199 = vsel %vm1148, %v1134, %v1198
    %v1200 = vsel %vm1150, %v1138, %v1199
    %vm1209 = vcmask 15360
    %v1210 = vsel %vm1209, %v1151, 0.0
    %1211 = vadd.xlane.f32.xlu0 %v1210
    %v1212 = vpop.xlane.xlu0 %1211
    %v1213 = vsel %vm1209, %v1158, 0.0
    %1214 = vadd.xlane.f32.xlu0 %v1213
    %v1215 = vpop.xlane.xlu0 %1214
    %v1216 = vsel %vm1209, %v1165, 0.0
    %1217 = vadd.xlane.f32.xlu0 %v1216
    %v1218 = vpop.xlane.xlu0 %1217
    %v1219 = vsel %vm1209, %v1172, 0.0
    %1220 = vadd.xlane.f32.xlu0 %v1219
    %v1221 = vpop.xlane.xlu0 %1220
    %v1222 = vsel %vm1209, %v1179, 0.0
    %1223 = vadd.xlane.f32.xlu0 %v1222
    %v1224 = vpop.xlane.xlu0 %1223
    %v1225 = vsel %vm1209, %v1186, 0.0
    %1226 = vadd.xlane.f32.xlu0 %v1225
    %v1227 = vpop.xlane.xlu0 %1226
    %v1228 = vsel %vm1209, %v1193, 0.0
    %1229 = vadd.xlane.f32.xlu0 %v1228
    %v1230 = vpop.xlane.xlu0 %1229
    %v1231 = vsel %vm1209, %v1200, 0.0
    %1232 = vadd.xlane.f32.xlu0 %v1231
    %v1233 = vpop.xlane.xlu0 %1232
    %v1234 = vxor.u32 %v1212, 2147483648
    %v1235 = vxor.u32 %v1215, 2147483648
    %v1236 = vxor.u32 %v1218, 2147483648
    %v1237 = vxor.u32 %v1221, 2147483648
    %v1238 = vxor.u32 %v1224, 2147483648
    %v1239 = vxor.u32 %v1227, 2147483648
    %v1240 = vxor.u32 %v1230, 2147483648
    %v1241 = vxor.u32 %v1233, 2147483648
    %v1242 = vmul.f32 %v1234, 1.442695
    %v1243 = vpow.pop %v1242
    %v1244 = vmul.f32 %v1235, 1.442695
    %v1245 = vpow.pop %v1244
    %v1246 = vmul.f32 %v1236, 1.442695
    %v1247 = vpow.pop %v1246
    %v1248 = vmul.f32 %v1237, 1.442695
    %v1249 = vpow.pop %v1248
    %v1250 = vmul.f32 %v1238, 1.442695
    %v1251 = vpow.pop %v1250
    %v1252 = vmul.f32 %v1239, 1.442695
    %v1253 = vpow.pop %v1252
    %v1254 = vmul.f32 %v1240, 1.442695
    %v1255 = vpow.pop %v1254
    %v1256 = vmul.f32 %v1241, 1.442695
    %v1257 = vpow.pop %v1256
    %v1258 = vadd.f32 %v1243, 1.0
    %v1259 = vadd.f32 %v1245, 1.0
    %v1260 = vadd.f32 %v1247, 1.0
    %v1261 = vadd.f32 %v1249, 1.0
    %v1262 = vadd.f32 %v1251, 1.0
    %v1263 = vadd.f32 %v1253, 1.0
    %v1264 = vadd.f32 %v1255, 1.0
    %v1265 = vadd.f32 %v1257, 1.0
    %v1266 = vrcp.pop %v1258
    %v1267 = vmul.f32 1.0, %v1266
    %v1268 = vrcp.pop %v1259
    %v1269 = vmul.f32 1.0, %v1268
    %v1270 = vrcp.pop %v1260
    %v1271 = vmul.f32 1.0, %v1270
    %v1272 = vrcp.pop %v1261
    %v1273 = vmul.f32 1.0, %v1272
    %v1274 = vrcp.pop %v1262
    %v1275 = vmul.f32 1.0, %v1274
    %v1276 = vrcp.pop %v1263
    %v1277 = vmul.f32 1.0, %v1276
    %v1278 = vrcp.pop %v1264
    %v1279 = vmul.f32 1.0, %v1278
    %v1280 = vrcp.pop %v1265
    %v1281 = vmul.f32 1.0, %v1280
    %v1290 = vlaneseq
    %v1291 = vshrl.u32 %v1290, 7
    %v1292 = vsub.s32 %v206, %v1291
    %v1293 = vrot.slane %v1267, %v1292
    %v1294 = vlaneseq
    %v1295 = vshrl.u32 %v1294, 7
    %v1296 = vsub.s32 %v211, %v1295
    %v1297 = vrot.slane %v1269, %v1296
    %v1298 = vsel %vm216, %v1297, %v1293
    %v1299 = vlaneseq
    %v1300 = vshrl.u32 %v1299, 7
    %v1301 = vsub.s32 %v218, %v1300
    %v1302 = vrot.slane %v1271, %v1301
    %v1303 = vsel %vm223, %v1302, %v1298
    %v1304 = vlaneseq
    %v1305 = vshrl.u32 %v1304, 7
    %v1306 = vsub.s32 %v225, %v1305
    %v1307 = vrot.slane %v1273, %v1306
    %v1308 = vsel %vm230, %v1307, %v1303
    %v1309 = vlaneseq
    %v1310 = vshrl.u32 %v1309, 7
    %v1311 = vsub.s32 %v206, %v1310
    %v1312 = vrot.slane %v1275, %v1311
    %v1313 = vlaneseq
    %v1314 = vshrl.u32 %v1313, 7
    %v1315 = vsub.s32 %v211, %v1314
    %v1316 = vrot.slane %v1277, %v1315
    %v1317 = vsel %vm216, %v1316, %v1312
    %v1318 = vlaneseq
    %v1319 = vshrl.u32 %v1318, 7
    %v1320 = vsub.s32 %v218, %v1319
    %v1321 = vrot.slane %v1279, %v1320
    %v1322 = vsel %vm223, %v1321, %v1317
    %v1323 = vlaneseq
    %v1324 = vshrl.u32 %v1323, 7
    %v1325 = vsub.s32 %v225, %v1324
    %v1326 = vrot.slane %v1281, %v1325
    %v1327 = vsel %vm230, %v1326, %v1322
    %vm1330 = vcmask 253952
    %1331 = vst.msk [vmem:[#allocation2] sm:$0x1] %vm1330, %v1308
    %1332 = vst.msk [vmem:[#allocation2 + $0x1] sm:$0x1] %vm1330, %v1327
    %v1333 = vld [vmem:[%s0] sm:$0xff]
    %v1334 = vld [vmem:[%s0 + $0x8] sm:$0xff]
    %v1335 = vld [vmem:[%s0 + $0x10] sm:$0xff]
    %v1336 = vld [vmem:[%s0 + $0x18] sm:$0xff]
    %v1337 = vld [vmem:[%s0 + $0x20] sm:$0xff]
    %v1338 = vld [vmem:[%s0 + $0x28] sm:$0xff]
    %v1339 = vld [vmem:[%s0 + $0x30] sm:$0xff]
    %v1340 = vld [vmem:[%s0 + $0x38] sm:$0xff]
    %v1341 = vld [vmem:[%s0 + $0x40] sm:$0xff]
    %v1342 = vld [vmem:[%s0 + $0x48] sm:$0xff]
    %v1343 = vld [vmem:[%s0 + $0x50] sm:$0xff]
    %v1344 = vld [vmem:[%s0 + $0x58] sm:$0xff]
    %v1345 = vld [vmem:[%s0 + $0x60] sm:$0xff]
    %v1346 = vld [vmem:[%s0 + $0x68] sm:$0xff]
    %v1347 = vld [vmem:[%s0 + $0x70] sm:$0xff]
    %v1348 = vld [vmem:[%s0 + $0x78] sm:$0xff]
    %v1349 = vmul.f32 %v1333, %v1267
    %v1350 = vmul.f32 %v1334, %v1267
    %v1351 = vmul.f32 %v1335, %v1269
    %v1352 = vmul.f32 %v1336, %v1269
    %v1353 = vmul.f32 %v1337, %v1271
    %v1354 = vmul.f32 %v1338, %v1271
    %v1355 = vmul.f32 %v1339, %v1273
    %v1356 = vmul.f32 %v1340, %v1273
    %v1357 = vmul.f32 %v1341, %v1275
    %v1358 = vmul.f32 %v1342, %v1275
    %v1359 = vmul.f32 %v1343, %v1277
    %v1360 = vmul.f32 %v1344, %v1277
    %v1361 = vmul.f32 %v1345, %v1279
    %v1362 = vmul.f32 %v1346, %v1279
    %v1363 = vmul.f32 %v1347, %v1281
    %v1364 = vmul.f32 %v1348, %v1281
    %1365 = vst [vmem:[%s3] sm:$0xff] %v1349
    %1366 = vst [vmem:[%s3 + $0x8] sm:$0xff] %v1350
    %1367 = vst [vmem:[%s3 + $0x10] sm:$0xff] %v1351
    %1368 = vst [vmem:[%s3 + $0x18] sm:$0xff] %v1352
    %1369 = vst [vmem:[%s3 + $0x20] sm:$0xff] %v1353
    %1370 = vst [vmem:[%s3 + $0x28] sm:$0xff] %v1354
    %1371 = vst [vmem:[%s3 + $0x30] sm:$0xff] %v1355
    %1372 = vst [vmem:[%s3 + $0x38] sm:$0xff] %v1356
    %1373 = vst [vmem:[%s3 + $0x40] sm:$0xff] %v1357
    %1374 = vst [vmem:[%s3 + $0x48] sm:$0xff] %v1358
    %1375 = vst [vmem:[%s3 + $0x50] sm:$0xff] %v1359
    %1376 = vst [vmem:[%s3 + $0x58] sm:$0xff] %v1360
    %1377 = vst [vmem:[%s3 + $0x60] sm:$0xff] %v1361
    %1378 = vst [vmem:[%s3 + $0x68] sm:$0xff] %v1362
    %1379 = vst [vmem:[%s3 + $0x70] sm:$0xff] %v1363
    %1380 = vst [vmem:[%s3 + $0x78] sm:$0xff] %v1364
    // Predicated region
    $region14: #{sparse_attention_block.1} parent=1 // pred_check
      _
    $region15: #{sparse_attention_block.1} parent=1 // pred_check_branch
      %1382 = sbr.rel (0) target = $region17
    $region16: #{sparse_attention_block.1} parent=1 // pred_region
      _
    $region17: #{sparse_attention_block.1} parent=1 // pred_fallthru
      _
    // Predicated region
    $region18: #{sparse_attention_block.1} parent=1 // pred_check
      _
    $region19: #{sparse_attention_block.1} parent=1 // pred_check_branch
      %1384 = sbr.rel (0) target = $region21
    $region20: #{sparse_attention_block.1} parent=1 // pred_region
      %s1386 = ssub.s32 32, 32
      %1387 = vsyncadd [#allocation3], %s1386
      %s1388 = sshll.u32 [#allocation2], 4
      %s1389 = int_to_ptr.vmem [resolvable:$true] %s1388
      %1394 = dma.vmem_to_hbm [thread:$0]  %s1389, 32, %s4, [#allocation3], 16, 16, 1
    $region21: #{sparse_attention_block.1} parent=1 // pred_fallthru
      _
    // Predicated region
    $region22: #{sparse_attention_block.1} parent=1 // pred_check
      _
    $region23: #{sparse_attention_block.1} parent=1 // pred_check_branch
      %1396 = sbr.rel (0) target = $region25
    $region24: #{sparse_attention_block.1} parent=1 // pred_region
      _
    $region25: #{sparse_attention_block.1} parent=1 // pred_fallthru
      _
    // Predicated region
    $region26: #{sparse_attention_block.1} parent=1 // pred_check
      _
    $region27: #{sparse_attention_block.1} parent=1 // pred_check_branch
      %1398 = sbr.rel (0) target = $region29
    $region28: #{sparse_attention_block.1} parent=1 // pred_region
      %1399 = dma.done [#allocation3], 32
    $region29: #{sparse_attention_block.1} parent=1 // pred_fallthru
      _
    %1400 = vsyncpa [#allocation3], 1

</llo_original>
